<compile_context>
chip_gen: v7x
topology: tpu7x:2x2x1
jax: 0.10.0
libtpu: 0.0.40
codegen_flags: <defaults>
</compile_context>

<pallas_src>
import functools

import numpy as np
import jax
import jax.numpy as jnp
from jax.experimental import pallas as pl
from jax.experimental.pallas import tpu as pltpu


# The fused matmul result is stored in the scratch at this lane offset so that
# every tap's shifted window read ([-W-1, +W+1] lanes) stays in bounds and the
# big store itself stays vreg-aligned (128 is a multiple of the 128-lane vreg).
_LANE_PAD = 128


def _make_tap_masks(h, w):
    """(9, H*W) f32 0/1 masks.

    Tap t = kh*3 + kw is valid at output pixel (y, x) iff the source pixel
    (y + kh - 1, x + kw - 1) lies inside the (unpadded) image.  Trace-time
    NumPy constants -> baked into the program, no runtime layout ops.
    """
    hw = h * w
    masks = np.zeros((9, hw), np.float32)
    yy, xx = np.meshgrid(np.arange(h), np.arange(w), indexing="ij")
    for kh in range(3):
        for kw in range(3):
            dh, dw = kh - 1, kw - 1
            valid = ((yy + dh >= 0) & (yy + dh < h) &
                     (xx + dw >= 0) & (xx + dw < w))
            masks[kh * 3 + kw] = valid.reshape(hw).astype(np.float32)
    return masks


def _relu_conv3x3_kernel(x_ref, w_ref, m_ref, o_ref, y_ref, *, width):
    # x_ref: (Cin, P)        f32   one image, channels on sublanes, pixels on lanes
    # w_ref: (9*Cout, Cin)   bf16  fused tap-major weights (tap t = kh*3 + kw)
    # m_ref: (9, P)          f32   0/1 validity mask per tap
    # o_ref: (Cout, P)       f32   output (free reshape to NCHW in the wrapper)
    # y_ref: (9*Cout, _LANE_PAD + P + width + 2) f32 VMEM scratch for the MXU result
    cout, p = o_ref.shape

    # ReLU in f32 (exact; padding is handled by masks so ReLU(0)=0 is irrelevant),
    # then cast to bf16 for the MXU.  Accumulation stays f32.
    x = jnp.maximum(x_ref[...], 0.0).astype(jnp.bfloat16)

    # Single fused MXU matmul covering all 9 taps: (9*Cout, Cin) @ (Cin, P).
    # Stored at a vreg-aligned lane offset inside the scratch.
    y_ref[:, pl.ds(_LANE_PAD, p)] = jnp.dot(
        w_ref[...], x, preferred_element_type=jnp.float32)

    # Shift-and-accumulate the 9 tap results on the small (Cout, P) output.
    # Row slices are 32-sublane aligned; the lane shift is absorbed by the
    # offset window read; wrapped / unwritten lanes are discarded by the select
    # (jnp.where does not propagate garbage/NaN from the unselected branch, so
    # the scratch needs no zero-initialisation).
    acc = jnp.zeros((cout, p), jnp.float32)
    for kh in range(3):
        for kw in range(3):
            t = kh * 3 + kw
            shift = (kh - 1) * width + (kw - 1)
            y_t = y_ref[pl.ds(t * cout, cout), pl.ds(_LANE_PAD + shift, p)]
            valid = m_ref[pl.ds(t, 1), :] > 0.5
            acc = acc + jnp.where(valid, y_t, 0.0)

    o_ref[...] = acc.astype(o_ref.dtype)


def relu_conv2d_3x3(x_nchw, weight_oihw):
    """ReLU followed by 3x3 / stride-1 / pad-1 conv (no bias). NCHW in, NCHW out."""
    n, cin, h, w = x_nchw.shape
    cout = weight_oihw.shape[0]
    assert weight_oihw.shape == (cout, cin, 3, 3)
    assert w + 2 <= _LANE_PAD, "image width too large for the fixed lane pad"
    hw = h * w

    # Activations: NCHW -> (N, Cin, H*W). Row-major flattening => metadata only.
    x2d = x_nchw.reshape(n, cin, hw)

    # Weights: OIHW -> tap-major fused (9*Cout, Cin); cast once to bf16 for the MXU.
    w_fused = jnp.transpose(weight_oihw, (2, 3, 0, 1)).reshape(9 * cout, cin)
    w_fused = w_fused.astype(jnp.bfloat16)

    # Per-tap validity masks (trace-time constants).
    masks = jnp.asarray(_make_tap_masks(h, w))

    kernel = functools.partial(_relu_conv3x3_kernel, width=w)

    out2d = pl.pallas_call(
        kernel,
        out_shape=jax.ShapeDtypeStruct((n, cout, hw), x_nchw.dtype),
        grid=(n,),
        in_specs=[
            pl.BlockSpec((None, cin, hw), lambda b: (b, 0, 0)),
            pl.BlockSpec((9 * cout, cin), lambda b: (0, 0)),
            pl.BlockSpec((9, hw), lambda b: (0, 0)),
        ],
        out_specs=pl.BlockSpec((None, cout, hw), lambda b: (b, 0, 0)),
        scratch_shapes=[
            pltpu.VMEM((9 * cout, _LANE_PAD + hw + w + 2), jnp.float32),
        ],
        compiler_params=pltpu.CompilerParams(
            dimension_semantics=("parallel",),
        ),
    )(x2d, w_fused, masks)

    # (N, Cout, H*W) -> (N, Cout, H, W): metadata-only reshape.
    return out2d.reshape(n, cout, h, w)


def _reference(x_nchw, weight_oihw, *, mxu_bf16):
    """Pure-JAX reference (XLA conv). `mxu_bf16=True` feeds the conv the same
    bf16-rounded operands the kernel feeds the MXU (f32 accumulation)."""
    xr = jnp.maximum(x_nchw, 0.0)
    wt = weight_oihw
    if mxu_bf16:
        xr = xr.astype(jnp.bfloat16)
        wt = wt.astype(jnp.bfloat16)
    return jax.lax.conv_general_dilated(
        xr, wt,
        window_strides=(1, 1),
        padding=((1, 1), (1, 1)),
        dimension_numbers=("NCHW", "OIHW", "NCHW"),
        preferred_element_type=jnp.float32,
    )


if __name__ == "__main__":
    key = jax.random.PRNGKey(0)
    kx, kw_ = jax.random.split(key)

    # Shapes implied by the module: x299 ~ [1, 128, 14, 14], weight [32, 128, 3, 3].
    x = jax.random.normal(kx, (1, 128, 14, 14), dtype=jnp.float32)
    weight = 0.05 * jax.random.normal(kw_, (32, 128, 3, 3), dtype=jnp.float32)

    run = jax.jit(relu_conv2d_3x3)
    out = jax.block_until_ready(run(x, weight))

    ref_bf16 = jax.block_until_ready(_reference(x, weight, mxu_bf16=True))
    ref_f32 = jax.block_until_ready(_reference(x, weight, mxu_bf16=False))

    assert out.shape == (1, 32, 14, 14), out.shape
    # Structural check: identical bf16 MXU inputs + f32 accumulation -> only
    # summation-order differences remain.
    assert jnp.allclose(out, ref_bf16, atol=5e-3, rtol=5e-3), \
        float(jnp.max(jnp.abs(out - ref_bf16)))
    # Fidelity vs the full-f32 (PyTorch-equivalent) reference: only bf16 input
    # rounding for the MXU separates the two.
    assert jnp.allclose(out, ref_f32, atol=5e-2, rtol=5e-2), \
        float(jnp.max(jnp.abs(out - ref_f32)))

    print("KERNEL_OK")
</pallas_src>

<mosaic_0001>
module attributes {stable_mosaic.version = 11 : i64} {
  func.func @_relu_conv3x3_kernel(%arg0: i32, %arg1: memref<1x128x196xf32, #tpu.memory_space<vmem>>, %arg2: memref<288x128xbf16, #tpu.memory_space<vmem>>, %arg3: memref<9x196xf32, #tpu.memory_space<vmem>>, %arg4: memref<1x32x196xf32, #tpu.memory_space<vmem>>, %arg5: memref<288x340xf32, #tpu.memory_space<vmem>>) attributes {dimension_semantics = [#tpu.dimension_semantics<parallel>], iteration_bounds = array<i64: 1>, scalar_prefetch = 0 : i64, scratch_operands = 1 : i64, tpu.core_type = #tpu.core_type<tc>, window_params = [{transform_indices = @transform_0, window_bounds = array<i64: 1, 128, 196>}, {pipeline_mode = #tpu.pipeline_mode<synchronous>, transform_indices = @transform_1, window_bounds = array<i64: 288, 128>}, {pipeline_mode = #tpu.pipeline_mode<synchronous>, transform_indices = @transform_2, window_bounds = array<i64: 9, 196>}, {transform_indices = @transform_3, window_bounds = array<i64: 1, 32, 196>}]} {
    %c0 = arith.constant 0 : index
    %c0_0 = arith.constant 0 : index
    %c0_1 = arith.constant 0 : index
    %0 = vector.load %arg1[%c0, %c0_0, %c0_1] : memref<1x128x196xf32, #tpu.memory_space<vmem>>, vector<1x128x196xf32>
    %1 = vector.shape_cast %0 : vector<1x128x196xf32> to vector<128x196xf32>
    %cst = arith.constant 0.000000e+00 : f32
    %2 = vector.broadcast %cst : f32 to vector<128x196xf32>
    %3 = arith.maximumf %1, %2 : vector<128x196xf32>
    %4 = arith.truncf %3 : vector<128x196xf32> to vector<128x196xbf16>
    %c0_2 = arith.constant 0 : index
    %c0_3 = arith.constant 0 : index
    %5 = vector.load %arg2[%c0_2, %c0_3] : memref<288x128xbf16, #tpu.memory_space<vmem>>, vector<288x128xbf16>
    %cst_4 = arith.constant dense<0.000000e+00> : vector<288x196xf32>
    %6 = tpu.matmul %5, %4, %cst_4 {dimension_numbers = #tpu.dot_dimension_numbers<[1], [0], [0], [1], [0, 0, 1, 1], [], []>} : vector<288x128xbf16>, vector<128x196xbf16>, vector<288x196xf32> -> vector<288x196xf32>
    %c0_5 = arith.constant 0 : index
    %c128 = arith.constant 128 : index
    %7 = vector.load %arg5[%c0_5, %c128] : memref<288x340xf32, #tpu.memory_space<vmem>>, vector<288x196xf32>
    tpu.vector_store %arg5[%c0_5, %c128], %6 {strides = array<i32>} : memref<288x340xf32, #tpu.memory_space<vmem>>, vector<288x196xf32>,
    %cst_6 = arith.constant 0.000000e+00 : f32
    %8 = vector.broadcast %cst_6 : f32 to vector<32x196xf32>
    %c0_7 = arith.constant 0 : index
    %c113 = arith.constant 113 : index
    %9 = vector.load %arg5[%c0_7, %c113] : memref<288x340xf32, #tpu.memory_space<vmem>>, vector<32x196xf32>
    %c0_8 = arith.constant 0 : index
    %c0_9 = arith.constant 0 : index
    %10 = vector.load %arg3[%c0_8, %c0_9] : memref<9x196xf32, #tpu.memory_space<vmem>>, vector<1x196xf32>
    %cst_10 = arith.constant 5.000000e-01 : f32
    %11 = vector.broadcast %cst_10 : f32 to vector<1x196xf32>
    %12 = arith.cmpf ogt, %10, %11 : vector<1x196xf32>
    %cst_11 = arith.constant 0.000000e+00 : f32
    %13 = vector.shape_cast %12 : vector<1x196xi1> to vector<1x196xi1>
    %14 = vector.broadcast %13 : vector<1x196xi1> to vector<32x196xi1>
    %15 = vector.broadcast %cst_11 : f32 to vector<32x196xf32>
    %16 = arith.select %14, %9, %15 : vector<32x196xi1>, vector<32x196xf32>
    %17 = arith.addf %8, %16 : vector<32x196xf32>
    %c32 = arith.constant 32 : index
    %c114 = arith.constant 114 : index
    %18 = vector.load %arg5[%c32, %c114] : memref<288x340xf32, #tpu.memory_space<vmem>>, vector<32x196xf32>
    %c1 = arith.constant 1 : index
    %c0_12 = arith.constant 0 : index
    %19 = vector.load %arg3[%c1, %c0_12] : memref<9x196xf32, #tpu.memory_space<vmem>>, vector<1x196xf32>
    %cst_13 = arith.constant 5.000000e-01 : f32
    %20 = vector.broadcast %cst_13 : f32 to vector<1x196xf32>
    %21 = arith.cmpf ogt, %19, %20 : vector<1x196xf32>
    %cst_14 = arith.constant 0.000000e+00 : f32
    %22 = vector.shape_cast %21 : vector<1x196xi1> to vector<1x196xi1>
    %23 = vector.broadcast %22 : vector<1x196xi1> to vector<32x196xi1>
    %24 = vector.broadcast %cst_14 : f32 to vector<32x196xf32>
    %25 = arith.select %23, %18, %24 : vector<32x196xi1>, vector<32x196xf32>
    %26 = arith.addf %17, %25 : vector<32x196xf32>
    %c64 = arith.constant 64 : index
    %c115 = arith.constant 115 : index
    %27 = vector.load %arg5[%c64, %c115] : memref<288x340xf32, #tpu.memory_space<vmem>>, vector<32x196xf32>
    %c2 = arith.constant 2 : index
    %c0_15 = arith.constant 0 : index
    %28 = vector.load %arg3[%c2, %c0_15] : memref<9x196xf32, #tpu.memory_space<vmem>>, vector<1x196xf32>
    %cst_16 = arith.constant 5.000000e-01 : f32
    %29 = vector.broadcast %cst_16 : f32 to vector<1x196xf32>
    %30 = arith.cmpf ogt, %28, %29 : vector<1x196xf32>
    %cst_17 = arith.constant 0.000000e+00 : f32
    %31 = vector.shape_cast %30 : vector<1x196xi1> to vector<1x196xi1>
    %32 = vector.broadcast %31 : vector<1x196xi1> to vector<32x196xi1>
    %33 = vector.broadcast %cst_17 : f32 to vector<32x196xf32>
    %34 = arith.select %32, %27, %33 : vector<32x196xi1>, vector<32x196xf32>
    %35 = arith.addf %26, %34 : vector<32x196xf32>
    %c96 = arith.constant 96 : index
    %c127 = arith.constant 127 : index
    %36 = vector.load %arg5[%c96, %c127] : memref<288x340xf32, #tpu.memory_space<vmem>>, vector<32x196xf32>
    %c3 = arith.constant 3 : index
    %c0_18 = arith.constant 0 : index
    %37 = vector.load %arg3[%c3, %c0_18] : memref<9x196xf32, #tpu.memory_space<vmem>>, vector<1x196xf32>
    %cst_19 = arith.constant 5.000000e-01 : f32
    %38 = vector.broadcast %cst_19 : f32 to vector<1x196xf32>
    %39 = arith.cmpf ogt, %37, %38 : vector<1x196xf32>
    %cst_20 = arith.constant 0.000000e+00 : f32
    %40 = vector.shape_cast %39 : vector<1x196xi1> to vector<1x196xi1>
    %41 = vector.broadcast %40 : vector<1x196xi1> to vector<32x196xi1>
    %42 = vector.broadcast %cst_20 : f32 to vector<32x196xf32>
    %43 = arith.select %41, %36, %42 : vector<32x196xi1>, vector<32x196xf32>
    %44 = arith.addf %35, %43 : vector<32x196xf32>
    %c128_21 = arith.constant 128 : index
    %c128_22 = arith.constant 128 : index
    %45 = vector.load %arg5[%c128_21, %c128_22] : memref<288x340xf32, #tpu.memory_space<vmem>>, vector<32x196xf32>
    %c4 = arith.constant 4 : index
    %c0_23 = arith.constant 0 : index
    %46 = vector.load %arg3[%c4, %c0_23] : memref<9x196xf32, #tpu.memory_space<vmem>>, vector<1x196xf32>
    %cst_24 = arith.constant 5.000000e-01 : f32
    %47 = vector.broadcast %cst_24 : f32 to vector<1x196xf32>
    %48 = arith.cmpf ogt, %46, %47 : vector<1x196xf32>
    %cst_25 = arith.constant 0.000000e+00 : f32
    %49 = vector.shape_cast %48 : vector<1x196xi1> to vector<1x196xi1>
    %50 = vector.broadcast %49 : vector<1x196xi1> to vector<32x196xi1>
    %51 = vector.broadcast %cst_25 : f32 to vector<32x196xf32>
    %52 = arith.select %50, %45, %51 : vector<32x196xi1>, vector<32x196xf32>
    %53 = arith.addf %44, %52 : vector<32x196xf32>
    %c160 = arith.constant 160 : index
    %c129 = arith.constant 129 : index
    %54 = vector.load %arg5[%c160, %c129] : memref<288x340xf32, #tpu.memory_space<vmem>>, vector<32x196xf32>
    %c5 = arith.constant 5 : index
    %c0_26 = arith.constant 0 : index
    %55 = vector.load %arg3[%c5, %c0_26] : memref<9x196xf32, #tpu.memory_space<vmem>>, vector<1x196xf32>
    %cst_27 = arith.constant 5.000000e-01 : f32
    %56 = vector.broadcast %cst_27 : f32 to vector<1x196xf32>
    %57 = arith.cmpf ogt, %55, %56 : vector<1x196xf32>
    %cst_28 = arith.constant 0.000000e+00 : f32
    %58 = vector.shape_cast %57 : vector<1x196xi1> to vector<1x196xi1>
    %59 = vector.broadcast %58 : vector<1x196xi1> to vector<32x196xi1>
    %60 = vector.broadcast %cst_28 : f32 to vector<32x196xf32>
    %61 = arith.select %59, %54, %60 : vector<32x196xi1>, vector<32x196xf32>
    %62 = arith.addf %53, %61 : vector<32x196xf32>
    %c192 = arith.constant 192 : index
    %c141 = arith.constant 141 : index
    %63 = vector.load %arg5[%c192, %c141] : memref<288x340xf32, #tpu.memory_space<vmem>>, vector<32x196xf32>
    %c6 = arith.constant 6 : index
    %c0_29 = arith.constant 0 : index
    %64 = vector.load %arg3[%c6, %c0_29] : memref<9x196xf32, #tpu.memory_space<vmem>>, vector<1x196xf32>
    %cst_30 = arith.constant 5.000000e-01 : f32
    %65 = vector.broadcast %cst_30 : f32 to vector<1x196xf32>
    %66 = arith.cmpf ogt, %64, %65 : vector<1x196xf32>
    %cst_31 = arith.constant 0.000000e+00 : f32
    %67 = vector.shape_cast %66 : vector<1x196xi1> to vector<1x196xi1>
    %68 = vector.broadcast %67 : vector<1x196xi1> to vector<32x196xi1>
    %69 = vector.broadcast %cst_31 : f32 to vector<32x196xf32>
    %70 = arith.select %68, %63, %69 : vector<32x196xi1>, vector<32x196xf32>
    %71 = arith.addf %62, %70 : vector<32x196xf32>
    %c224 = arith.constant 224 : index
    %c142 = arith.constant 142 : index
    %72 = vector.load %arg5[%c224, %c142] : memref<288x340xf32, #tpu.memory_space<vmem>>, vector<32x196xf32>
    %c7 = arith.constant 7 : index
    %c0_32 = arith.constant 0 : index
    %73 = vector.load %arg3[%c7, %c0_32] : memref<9x196xf32, #tpu.memory_space<vmem>>, vector<1x196xf32>
    %cst_33 = arith.constant 5.000000e-01 : f32
    %74 = vector.broadcast %cst_33 : f32 to vector<1x196xf32>
    %75 = arith.cmpf ogt, %73, %74 : vector<1x196xf32>
    %cst_34 = arith.constant 0.000000e+00 : f32
    %76 = vector.shape_cast %75 : vector<1x196xi1> to vector<1x196xi1>
    %77 = vector.broadcast %76 : vector<1x196xi1> to vector<32x196xi1>
    %78 = vector.broadcast %cst_34 : f32 to vector<32x196xf32>
    %79 = arith.select %77, %72, %78 : vector<32x196xi1>, vector<32x196xf32>
    %80 = arith.addf %71, %79 : vector<32x196xf32>
    %c256 = arith.constant 256 : index
    %c143 = arith.constant 143 : index
    %81 = vector.load %arg5[%c256, %c143] : memref<288x340xf32, #tpu.memory_space<vmem>>, vector<32x196xf32>
    %c8 = arith.constant 8 : index
    %c0_35 = arith.constant 0 : index
    %82 = vector.load %arg3[%c8, %c0_35] : memref<9x196xf32, #tpu.memory_space<vmem>>, vector<1x196xf32>
    %cst_36 = arith.constant 5.000000e-01 : f32
    %83 = vector.broadcast %cst_36 : f32 to vector<1x196xf32>
    %84 = arith.cmpf ogt, %82, %83 : vector<1x196xf32>
    %cst_37 = arith.constant 0.000000e+00 : f32
    %85 = vector.shape_cast %84 : vector<1x196xi1> to vector<1x196xi1>
    %86 = vector.broadcast %85 : vector<1x196xi1> to vector<32x196xi1>
    %87 = vector.broadcast %cst_37 : f32 to vector<32x196xf32>
    %88 = arith.select %86, %81, %87 : vector<32x196xi1>, vector<32x196xf32>
    %89 = arith.addf %80, %88 : vector<32x196xf32>
    %c0_38 = arith.constant 0 : index
    %c0_39 = arith.constant 0 : index
    %c0_40 = arith.constant 0 : index
    %90 = vector.load %arg4[%c0_38, %c0_39, %c0_40] : memref<1x32x196xf32, #tpu.memory_space<vmem>>, vector<1x32x196xf32>
    %91 = vector.shape_cast %90 : vector<1x32x196xf32> to vector<32x196xf32>
    %92 = vector.shape_cast %89 : vector<32x196xf32> to vector<1x32x196xf32>
    tpu.vector_store %arg4[%c0_38, %c0_39, %c0_40], %92 {strides = array<i32>} : memref<1x32x196xf32, #tpu.memory_space<vmem>>, vector<1x32x196xf32>,
    return
  }
  func.func @transform_0(%arg0: i32) -> (i32, i32, i32) {
    %c0_i32 = arith.constant 0 : i32
    %c0_i32_0 = arith.constant 0 : i32
    %c0_i32_1 = arith.constant 0 : i32
    return %arg0, %c0_i32, %c0_i32_0 : i32, i32, i32
  }
  func.func @transform_1(%arg0: i32) -> (i32, i32) {
    %c0_i32 = arith.constant 0 : i32
    %c0_i32_0 = arith.constant 0 : i32
    %c0_i32_1 = arith.constant 0 : i32
    return %c0_i32, %c0_i32_0 : i32, i32
  }
  func.func @transform_2(%arg0: i32) -> (i32, i32) {
    %c0_i32 = arith.constant 0 : i32
    %c0_i32_0 = arith.constant 0 : i32
    %c0_i32_1 = arith.constant 0 : i32
    return %c0_i32, %c0_i32_0 : i32, i32
  }
  func.func @transform_3(%arg0: i32) -> (i32, i32, i32) {
    %c0_i32 = arith.constant 0 : i32
    %c0_i32_0 = arith.constant 0 : i32
    %c0_i32_1 = arith.constant 0 : i32
    return %arg0, %c0_i32, %c0_i32_0 : i32, i32, i32
  }
}

</mosaic_0001>

<llo_original>
// kernel: relu_conv2d_3x3.1
$region0: #{relu_conv2d_3x3.1}
  #allocation0 [shape = 'u32[]', space=smem, size = 0x4, offset = 0x4, fixed_abs, tag = 'smem constant byte address 0x4 - core index']
  #allocation1 [shape = 'u32[144,128]{1,0:T(1,128)}', space=vmem, size = 0x12000, scoped, tag = 'internal scratch']
  #allocation2 [shape = 'f32[288,340]{1,0:T(8,128)}', space=vmem, size = 0x6c000, scoped, tag = 'scratch operand']
  %s0 = inlined_call_operand.vmem [shape: f32[1,128,196], index: 0, kind: input, shape index: {}]
  %s1 = inlined_call_operand.vmem [shape: bf16[288,128], index: 1, kind: input, shape index: {}]
  %s2 = inlined_call_operand.vmem [shape: f32[9,196], index: 2, kind: input, shape index: {}]
  %s3 = inlined_call_operand.vmem [shape: f32[1,32,196], index: 3, kind: output, shape index: {}]
  %s4 = sld [smem:[#allocation0]]
  $region22: #{relu_conv2d_3x3.1} parent=0
    _
  %s6 = ssub.s32 1, %s4
  %s7 = scalar_select 0, %s6, %s4
  // Predicated region
  $region2: #{relu_conv2d_3x3.1} parent=0 // pred_check
    _
  $region3: #{relu_conv2d_3x3.1} parent=0 // pred_check_branch
    %9 = sbr.rel (0) target = $region5
  $region4: #{relu_conv2d_3x3.1} parent=0 // pred_region
    _
  $region5: #{relu_conv2d_3x3.1} parent=0 // pred_fallthru
    _
  // Predicated region
  $region6: #{relu_conv2d_3x3.1} parent=0 // pred_check
    _
  $region7: #{relu_conv2d_3x3.1} parent=0 // pred_check_branch
    %11 = sbr.rel (0) target = $region9
  $region8: #{relu_conv2d_3x3.1} parent=0 // pred_region
    _
  $region9: #{relu_conv2d_3x3.1} parent=0 // pred_fallthru
    _
  // Predicated region
  $region10: #{relu_conv2d_3x3.1} parent=0 // pred_check
    _
  $region11: #{relu_conv2d_3x3.1} parent=0 // pred_check_branch
    %13 = sbr.rel (0) target = $region13
  $region12: #{relu_conv2d_3x3.1} parent=0 // pred_region
    _
  $region13: #{relu_conv2d_3x3.1} parent=0 // pred_fallthru
    _
  %v15 = vld [vmem:[%s0] sm:$0xff]
  %v16 = vld [vmem:[%s0 + $0x8] sm:$0xff]
  %v17 = vld [vmem:[%s0 + $0x10] sm:$0xff]
  %v18 = vld [vmem:[%s0 + $0x18] sm:$0xff]
  %v19 = vld [vmem:[%s0 + $0x20] sm:$0xff]
  %v20 = vld [vmem:[%s0 + $0x28] sm:$0xff]
  %v21 = vld [vmem:[%s0 + $0x30] sm:$0xff]
  %v22 = vld [vmem:[%s0 + $0x38] sm:$0xff]
  %v23 = vld [vmem:[%s0 + $0x40] sm:$0xff]
  %v24 = vld [vmem:[%s0 + $0x48] sm:$0xff]
  %v25 = vld [vmem:[%s0 + $0x50] sm:$0xff]
  %v26 = vld [vmem:[%s0 + $0x58] sm:$0xff]
  %v27 = vld [vmem:[%s0 + $0x60] sm:$0xff]
  %v28 = vld [vmem:[%s0 + $0x68] sm:$0xff]
  %v29 = vld [vmem:[%s0 + $0x70] sm:$0xff]
  %v30 = vld [vmem:[%s0 + $0x78] sm:$0xff]
  %v31 = vld [vmem:[%s0 + $0x80] sm:$0xff]
  %v32 = vld [vmem:[%s0 + $0x88] sm:$0xff]
  %v33 = vld [vmem:[%s0 + $0x90] sm:$0xff]
  %v34 = vld [vmem:[%s0 + $0x98] sm:$0xff]
  %v35 = vld [vmem:[%s0 + $0xa0] sm:$0xff]
  %v36 = vld [vmem:[%s0 + $0xa8] sm:$0xff]
  %v37 = vld [vmem:[%s0 + $0xb0] sm:$0xff]
  %v38 = vld [vmem:[%s0 + $0xb8] sm:$0xff]
  %v39 = vld [vmem:[%s0 + $0xc0] sm:$0xff]
  %v40 = vld [vmem:[%s0 + $0xc8] sm:$0xff]
  %v41 = vld [vmem:[%s0 + $0xd0] sm:$0xff]
  %v42 = vld [vmem:[%s0 + $0xd8] sm:$0xff]
  %v43 = vld [vmem:[%s0 + $0xe0] sm:$0xff]
  %v44 = vld [vmem:[%s0 + $0xe8] sm:$0xff]
  %v45 = vld [vmem:[%s0 + $0xf0] sm:$0xff]
  %v46 = vld [vmem:[%s0 + $0xf8] sm:$0xff]
  %v47 = vmax.f32 %v15, 0.0
  %v48 = vmax.f32 %v16, 0.0
  %v49 = vmax.f32 %v17, 0.0
  %v50 = vmax.f32 %v18, 0.0
  %v51 = vmax.f32 %v19, 0.0
  %v52 = vmax.f32 %v20, 0.0
  %v53 = vmax.f32 %v21, 0.0
  %v54 = vmax.f32 %v22, 0.0
  %v55 = vmax.f32 %v23, 0.0
  %v56 = vmax.f32 %v24, 0.0
  %v57 = vmax.f32 %v25, 0.0
  %v58 = vmax.f32 %v26, 0.0
  %v59 = vmax.f32 %v27, 0.0
  %v60 = vmax.f32 %v28, 0.0
  %v61 = vmax.f32 %v29, 0.0
  %v62 = vmax.f32 %v30, 0.0
  %v63 = vmax.f32 %v31, 0.0
  %v64 = vmax.f32 %v32, 0.0
  %v65 = vmax.f32 %v33, 0.0
  %v66 = vmax.f32 %v34, 0.0
  %v67 = vmax.f32 %v35, 0.0
  %v68 = vmax.f32 %v36, 0.0
  %v69 = vmax.f32 %v37, 0.0
  %v70 = vmax.f32 %v38, 0.0
  %v71 = vmax.f32 %v39, 0.0
  %v72 = vmax.f32 %v40, 0.0
  %v73 = vmax.f32 %v41, 0.0
  %v74 = vmax.f32 %v42, 0.0
  %v75 = vmax.f32 %v43, 0.0
  %v76 = vmax.f32 %v44, 0.0
  %v77 = vmax.f32 %v45, 0.0
  %v78 = vmax.f32 %v46, 0.0
  %v79 = vpack.c.bf16 %v49, %v47
  %v80 = vpack.c.bf16 %v50, %v48
  %v81 = vpack.c.bf16 %v53, %v51
  %v82 = vpack.c.bf16 %v54, %v52
  %v83 = vpack.c.bf16 %v57, %v55
  %v84 = vpack.c.bf16 %v58, %v56
  %v85 = vpack.c.bf16 %v61, %v59
  %v86 = vpack.c.bf16 %v62, %v60
  %v87 = vpack.c.bf16 %v65, %v63
  %v88 = vpack.c.bf16 %v66, %v64
  %v89 = vpack.c.bf16 %v69, %v67
  %v90 = vpack.c.bf16 %v70, %v68
  %v91 = vpack.c.bf16 %v73, %v71
  %v92 = vpack.c.bf16 %v74, %v72
  %v93 = vpack.c.bf16 %v77, %v75
  %v94 = vpack.c.bf16 %v78, %v76
  %v95 = vld [vmem:[%s1] sm:$0xf]
  %v96 = vld [vmem:[%s1 + $0x4] sm:$0xf]
  %v97 = vld [vmem:[%s1 + $0x8] sm:$0xf]
  %v98 = vld [vmem:[%s1 + $0xc] sm:$0xf]
  %v99 = vld [vmem:[%s1 + $0x10] sm:$0xf]
  %v100 = vld [vmem:[%s1 + $0x14] sm:$0xf]
  %v101 = vld [vmem:[%s1 + $0x18] sm:$0xf]
  %v102 = vld [vmem:[%s1 + $0x1c] sm:$0xf]
  %v103 = vld [vmem:[%s1 + $0x20] sm:$0xf]
  %v104 = vld [vmem:[%s1 + $0x24] sm:$0xf]
  %v105 = vld [vmem:[%s1 + $0x28] sm:$0xf]
  %v106 = vld [vmem:[%s1 + $0x2c] sm:$0xf]
  %v107 = vld [vmem:[%s1 + $0x30] sm:$0xf]
  %v108 = vld [vmem:[%s1 + $0x34] sm:$0xf]
  %v109 = vld [vmem:[%s1 + $0x38] sm:$0xf]
  %v110 = vld [vmem:[%s1 + $0x3c] sm:$0xf]
  %v111 = vld [vmem:[%s1 + $0x40] sm:$0xf]
  %v112 = vld [vmem:[%s1 + $0x44] sm:$0xf]
  %v113 = vld [vmem:[%s1 + $0x48] sm:$0xf]
  %v114 = vld [vmem:[%s1 + $0x4c] sm:$0xf]
  %v115 = vld [vmem:[%s1 + $0x50] sm:$0xf]
  %v116 = vld [vmem:[%s1 + $0x54] sm:$0xf]
  %v117 = vld [vmem:[%s1 + $0x58] sm:$0xf]
  %v118 = vld [vmem:[%s1 + $0x5c] sm:$0xf]
  %v119 = vld [vmem:[%s1 + $0x60] sm:$0xf]
  %v120 = vld [vmem:[%s1 + $0x64] sm:$0xf]
  %v121 = vld [vmem:[%s1 + $0x68] sm:$0xf]
  %v122 = vld [vmem:[%s1 + $0x6c] sm:$0xf]
  %v123 = vld [vmem:[%s1 + $0x70] sm:$0xf]
  %v124 = vld [vmem:[%s1 + $0x74] sm:$0xf]
  %v125 = vld [vmem:[%s1 + $0x78] sm:$0xf]
  %v126 = vld [vmem:[%s1 + $0x7c] sm:$0xf]
  %v127 = vld [vmem:[%s1 + $0x80] sm:$0xf]
  %v128 = vld [vmem:[%s1 + $0x84] sm:$0xf]
  %v129 = vld [vmem:[%s1 + $0x88] sm:$0xf]
  %v130 = vld [vmem:[%s1 + $0x8c] sm:$0xf]
  %v167 = vunpack.c.l.b16 %v95
  %v168 = vunpack.c.l.b16 %v96
  %v169 = vunpack.c.l.b16 %v97
  %v170 = vunpack.c.l.b16 %v98
  %v171 = vunpack.c.l.b16 %v99
  %v172 = vunpack.c.l.b16 %v100
  %v173 = vunpack.c.l.b16 %v101
  %v174 = vunpack.c.l.b16 %v102
  %v175 = vunpack.c.l.b16 %v103
  %v176 = vunpack.c.l.b16 %v104
  %v177 = vunpack.c.l.b16 %v105
  %v178 = vunpack.c.l.b16 %v106
  %v179 = vunpack.c.l.b16 %v107
  %v180 = vunpack.c.l.b16 %v108
  %v181 = vunpack.c.l.b16 %v109
  %v182 = vunpack.c.l.b16 %v110
  %v183 = vunpack.c.l.b16 %v111
  %v184 = vunpack.c.l.b16 %v112
  %v185 = vunpack.c.l.b16 %v113
  %v186 = vunpack.c.l.b16 %v114
  %v187 = vunpack.c.l.b16 %v115
  %v188 = vunpack.c.l.b16 %v116
  %v189 = vunpack.c.l.b16 %v117
  %v190 = vunpack.c.l.b16 %v118
  %v191 = vunpack.c.l.b16 %v119
  %v192 = vunpack.c.l.b16 %v120
  %v193 = vunpack.c.l.b16 %v121
  %v194 = vunpack.c.l.b16 %v122
  %v195 = vunpack.c.l.b16 %v123
  %v196 = vunpack.c.l.b16 %v124
  %v197 = vunpack.c.l.b16 %v125
  %v198 = vunpack.c.l.b16 %v126
  %v199 = vunpack.c.l.b16 %v127
  %v200 = vunpack.c.l.b16 %v128
  %v201 = vunpack.c.l.b16 %v129
  %v202 = vunpack.c.l.b16 %v130
  %v203 = vpack.c.b16 %v168, %v167
  %v204 = vpack.c.b16 %v170, %v169
  %v205 = vpack.c.b16 %v172, %v171
  %v206 = vpack.c.b16 %v174, %v173
  %v207 = vpack.c.b16 %v176, %v175
  %v208 = vpack.c.b16 %v178, %v177
  %v209 = vpack.c.b16 %v180, %v179
  %v210 = vpack.c.b16 %v182, %v181
  %v211 = vpack.c.b16 %v184, %v183
  %v212 = vpack.c.b16 %v186, %v185
  %v213 = vpack.c.b16 %v188, %v187
  %v214 = vpack.c.b16 %v190, %v189
  %v215 = vpack.c.b16 %v192, %v191
  %v216 = vpack.c.b16 %v194, %v193
  %v217 = vpack.c.b16 %v196, %v195
  %v218 = vpack.c.b16 %v198, %v197
  %v219 = vpack.c.b16 %v200, %v199
  %v220 = vpack.c.b16 %v202, %v201
  %239 = vmatprep.subr.bf16.mxu0 %v80
  %240 = vmatpush1.bf16.msra.mxu0 %v79
  %241 = vmatprep.subr.bf16.mxu0 %v82
  %242 = vmatpush1.bf16.msra.mxu0 %v81
  %243 = vmatprep.subr.bf16.mxu0 %v84
  %244 = vmatpush1.bf16.msra.mxu0 %v83
  %245 = vmatprep.subr.bf16.mxu0 %v86
  %246 = vmatpush1.bf16.msra.mxu0 %v85
  %247 = vmatprep.subr.bf16.mxu0 %v88
  %248 = vmatpush1.bf16.msra.mxu0 %v87
  %249 = vmatprep.subr.bf16.mxu0 %v90
  %250 = vmatpush1.bf16.msra.mxu0 %v89
  %251 = vmatprep.subr.bf16.mxu0 %v92
  %252 = vmatpush1.bf16.msra.mxu0 %v91
  %253 = vmatprep.subr.bf16.mxu0 %v94
  %254 = vmatpush1.bf16.msra.mxu0 %v93
  %255 = vmatprep.subr.bf16.mxu0 0
  %256 = vmatpush1.bf16.msra.mxu0 0
  %257 = vmatprep.subr.bf16.mxu0 0
  %258 = vmatpush1.bf16.msra.mxu0 0
  %259 = vmatprep.subr.bf16.mxu0 0
  %260 = vmatpush1.bf16.msra.mxu0 0
  %261 = vmatprep.subr.bf16.mxu0 0
  %262 = vmatpush1.bf16.msra.mxu0 0
  %263 = vmatprep.subr.bf16.mxu0 0
  %264 = vmatpush1.bf16.msra.mxu0 0
  %265 = vmatprep.subr.bf16.mxu0 0
  %266 = vmatpush1.bf16.msra.mxu0 0
  %267 = vmatprep.subr.bf16.mxu0 0
  %268 = vmatpush1.bf16.msra.mxu0 0
  %269 = vmatprep.subr.bf16.mxu0 0
  %270 = vmatpush1.bf16.msra.mxu0 0
  %271 = vmatprep.mubr.bf16.mxu0 0
  %272 = vmatmul.mubr.bf16.gmra.mrb[0].mxu0 %v203
  %v273 = vpop.f32.mrb[0].mxu0
  %v274 = vadd.f32 0.0, %v273
  %v275 = vpop.f32.mrb[0].mxu0
  %v276 = vadd.f32 0.0, %v275
  %v277 = vpop.f32.mrb[0].mxu0
  %v278 = vadd.f32 0.0, %v277
  %v279 = vpop.f32.mrb[0].mxu0
  %v280 = vadd.f32 0.0, %v279
  %281 = vmatprep.mubr.bf16.mxu0 0
  %282 = vmatmul.mubr.bf16.gmra.mrb[0].mxu0 %v204
  %v283 = vpop.f32.mrb[0].mxu0
  %v284 = vadd.f32 0.0, %v283
  %v285 = vpop.f32.mrb[0].mxu0
  %v286 = vadd.f32 0.0, %v285
  %v287 = vpop.f32.mrb[0].mxu0
  %v288 = vadd.f32 0.0, %v287
  %v289 = vpop.f32.mrb[0].mxu0
  %v290 = vadd.f32 0.0, %v289
  %291 = vmatprep.mubr.bf16.mxu0 0
  %292 = vmatmul.mubr.bf16.gmra.mrb[0].mxu0 %v205
  %v293 = vpop.f32.mrb[0].mxu0
  %v294 = vadd.f32 0.0, %v293
  %v295 = vpop.f32.mrb[0].mxu0
  %v296 = vadd.f32 0.0, %v295
  %v297 = vpop.f32.mrb[0].mxu0
  %v298 = vadd.f32 0.0, %v297
  %v299 = vpop.f32.mrb[0].mxu0
  %v300 = vadd.f32 0.0, %v299
  %301 = vmatprep.mubr.bf16.mxu0 0
  %302 = vmatmul.mubr.bf16.gmra.mrb[0].mxu0 %v206
  %v303 = vpop.f32.mrb[0].mxu0
  %v304 = vadd.f32 0.0, %v303
  %v305 = vpop.f32.mrb[0].mxu0
  %v306 = vadd.f32 0.0, %v305
  %v307 = vpop.f32.mrb[0].mxu0
  %v308 = vadd.f32 0.0, %v307
  %v309 = vpop.f32.mrb[0].mxu0
  %v310 = vadd.f32 0.0, %v309
  %311 = vmatprep.mubr.bf16.mxu0 0
  %312 = vmatmul.mubr.bf16.gmra.mrb[0].mxu0 %v207
  %v313 = vpop.f32.mrb[0].mxu0
  %v314 = vadd.f32 0.0, %v313
  %v315 = vpop.f32.mrb[0].mxu0
  %v316 = vadd.f32 0.0, %v315
  %v317 = vpop.f32.mrb[0].mxu0
  %v318 = vadd.f32 0.0, %v317
  %v319 = vpop.f32.mrb[0].mxu0
  %v320 = vadd.f32 0.0, %v319
  %321 = vmatprep.mubr.bf16.mxu0 0
  %322 = vmatmul.mubr.bf16.gmra.mrb[0].mxu0 %v208
  %v323 = vpop.f32.mrb[0].mxu0
  %v324 = vadd.f32 0.0, %v323
  %v325 = vpop.f32.mrb[0].mxu0
  %v326 = vadd.f32 0.0, %v325
  %v327 = vpop.f32.mrb[0].mxu0
  %v328 = vadd.f32 0.0, %v327
  %v329 = vpop.f32.mrb[0].mxu0
  %v330 = vadd.f32 0.0, %v329
  %331 = vmatprep.mubr.bf16.mxu0 0
  %332 = vmatmul.mubr.bf16.gmra.mrb[0].mxu0 %v209
  %v333 = vpop.f32.mrb[0].mxu0
  %v334 = vadd.f32 0.0, %v333
  %v335 = vpop.f32.mrb[0].mxu0
  %v336 = vadd.f32 0.0, %v335
  %v337 = vpop.f32.mrb[0].mxu0
  %v338 = vadd.f32 0.0, %v337
  %v339 = vpop.f32.mrb[0].mxu0
  %v340 = vadd.f32 0.0, %v339
  %341 = vmatprep.mubr.bf16.mxu0 0
  %342 = vmatmul.mubr.bf16.gmra.mrb[0].mxu0 %v210
  %v343 = vpop.f32.mrb[0].mxu0
  %v344 = vadd.f32 0.0, %v343
  %v345 = vpop.f32.mrb[0].mxu0
  %v346 = vadd.f32 0.0, %v345
  %v347 = vpop.f32.mrb[0].mxu0
  %v348 = vadd.f32 0.0, %v347
  %v349 = vpop.f32.mrb[0].mxu0
  %v350 = vadd.f32 0.0, %v349
  %351 = vmatprep.mubr.bf16.mxu0 0
  %352 = vmatmul.mubr.bf16.gmra.mrb[0].mxu0 %v211
  %v353 = vpop.f32.mrb[0].mxu0
  %v354 = vadd.f32 0.0, %v353
  %v355 = vpop.f32.mrb[0].mxu0
  %v356 = vadd.f32 0.0, %v355
  %v357 = vpop.f32.mrb[0].mxu0
  %v358 = vadd.f32 0.0, %v357
  %v359 = vpop.f32.mrb[0].mxu0
  %v360 = vadd.f32 0.0, %v359
  %361 = vmatprep.mubr.bf16.mxu0 0
  %362 = vmatmul.mubr.bf16.gmra.mrb[0].mxu0 %v212
  %v363 = vpop.f32.mrb[0].mxu0
  %v364 = vadd.f32 0.0, %v363
  %v365 = vpop.f32.mrb[0].mxu0
  %v366 = vadd.f32 0.0, %v365
  %v367 = vpop.f32.mrb[0].mxu0
  %v368 = vadd.f32 0.0, %v367
  %v369 = vpop.f32.mrb[0].mxu0
  %v370 = vadd.f32 0.0, %v369
  %371 = vmatprep.mubr.bf16.mxu0 0
  %372 = vmatmul.mubr.bf16.gmra.mrb[0].mxu0 %v213
  %v373 = vpop.f32.mrb[0].mxu0
  %v374 = vadd.f32 0.0, %v373
  %v375 = vpop.f32.mrb[0].mxu0
  %v376 = vadd.f32 0.0, %v375
  %v377 = vpop.f32.mrb[0].mxu0
  %v378 = vadd.f32 0.0, %v377
  %v379 = vpop.f32.mrb[0].mxu0
  %v380 = vadd.f32 0.0, %v379
  %381 = vmatprep.mubr.bf16.mxu0 0
  %382 = vmatmul.mubr.bf16.gmra.mrb[0].mxu0 %v214
  %v383 = vpop.f32.mrb[0].mxu0
  %v384 = vadd.f32 0.0, %v383
  %v385 = vpop.f32.mrb[0].mxu0
  %v386 = vadd.f32 0.0, %v385
  %v387 = vpop.f32.mrb[0].mxu0
  %v388 = vadd.f32 0.0, %v387
  %v389 = vpop.f32.mrb[0].mxu0
  %v390 = vadd.f32 0.0, %v389
  %391 = vmatprep.mubr.bf16.mxu0 0
  %392 = vmatmul.mubr.bf16.gmra.mrb[0].mxu0 %v215
  %v393 = vpop.f32.mrb[0].mxu0
  %v394 = vadd.f32 0.0, %v393
  %v395 = vpop.f32.mrb[0].mxu0
  %v396 = vadd.f32 0.0, %v395
  %v397 = vpop.f32.mrb[0].mxu0
  %v398 = vadd.f32 0.0, %v397
  %v399 = vpop.f32.mrb[0].mxu0
  %v400 = vadd.f32 0.0, %v399
  %401 = vmatprep.mubr.bf16.mxu0 0
  %402 = vmatmul.mubr.bf16.gmra.mrb[0].mxu0 %v216
  %v403 = vpop.f32.mrb[0].mxu0
  %v404 = vadd.f32 0.0, %v403
  %v405 = vpop.f32.mrb[0].mxu0
  %v406 = vadd.f32 0.0, %v405
  %v407 = vpop.f32.mrb[0].mxu0
  %v408 = vadd.f32 0.0, %v407
  %v409 = vpop.f32.mrb[0].mxu0
  %v410 = vadd.f32 0.0, %v409
  %411 = vmatprep.mubr.bf16.mxu0 0
  %412 = vmatmul.mubr.bf16.gmra.mrb[0].mxu0 %v217
  %v413 = vpop.f32.mrb[0].mxu0
  %v414 = vadd.f32 0.0, %v413
  %v415 = vpop.f32.mrb[0].mxu0
  %v416 = vadd.f32 0.0, %v415
  %v417 = vpop.f32.mrb[0].mxu0
  %v418 = vadd.f32 0.0, %v417
  %v419 = vpop.f32.mrb[0].mxu0
  %v420 = vadd.f32 0.0, %v419
  %421 = vmatprep.mubr.bf16.mxu0 0
  %422 = vmatmul.mubr.bf16.gmra.mrb[0].mxu0 %v218
  %v423 = vpop.f32.mrb[0].mxu0
  %v424 = vadd.f32 0.0, %v423
  %v425 = vpop.f32.mrb[0].mxu0
  %v426 = vadd.f32 0.0, %v425
  %v427 = vpop.f32.mrb[0].mxu0
  %v428 = vadd.f32 0.0, %v427
  %v429 = vpop.f32.mrb[0].mxu0
  %v430 = vadd.f32 0.0, %v429
  %431 = vmatprep.mubr.bf16.mxu0 0
  %432 = vmatmul.mubr.bf16.gmra.mrb[0].mxu0 %v219
  %v433 = vpop.f32.mrb[0].mxu0
  %v434 = vadd.f32 0.0, %v433
  %v435 = vpop.f32.mrb[0].mxu0
  %v436 = vadd.f32 0.0, %v435
  %v437 = vpop.f32.mrb[0].mxu0
  %v438 = vadd.f32 0.0, %v437
  %v439 = vpop.f32.mrb[0].mxu0
  %v440 = vadd.f32 0.0, %v439
  %441 = vmatprep.mubr.bf16.mxu0 0
  %442 = vmatmul.mubr.bf16.gmra.mrb[0].mxu0 %v220
  %v443 = vpop.f32.mrb[0].mxu0
  %v444 = vadd.f32 0.0, %v443
  %v445 = vpop.f32.mrb[0].mxu0
  %v446 = vadd.f32 0.0, %v445
  %v447 = vpop.f32.mrb[0].mxu0
  %v448 = vadd.f32 0.0, %v447
  %v449 = vpop.f32.mrb[0].mxu0
  %v450 = vadd.f32 0.0, %v449
  %451 = vdwg.mxu0
  %452 = vst [vmem:[#allocation2 + $0x8] sm:$0xff] %v274
  %vm453 = vcmask 556032
  %454 = vst.msk [vmem:[#allocation2 + $0x10] sm:$0xff] %vm453, %v276
  %455 = vst [vmem:[#allocation2 + $0x20] sm:$0xff] %v278
  %456 = vst.msk [vmem:[#allocation2 + $0x28] sm:$0xff] %vm453, %v280
  %457 = vst [vmem:[#allocation2 + $0x38] sm:$0xff] %v284
  %458 = vst.msk [vmem:[#allocation2 + $0x40] sm:$0xff] %vm453, %v286
  %459 = vst [vmem:[#allocation2 + $0x50] sm:$0xff] %v288
  %460 = vst.msk [vmem:[#allocation2 + $0x58] sm:$0xff] %vm453, %v290
  %461 = vst [vmem:[#allocation2 + $0x68] sm:$0xff] %v294
  %462 = vst.msk [vmem:[#allocation2 + $0x70] sm:$0xff] %vm453, %v296
  %463 = vst [vmem:[#allocation2 + $0x80] sm:$0xff] %v298
  %464 = vst.msk [vmem:[#allocation2 + $0x88] sm:$0xff] %vm453, %v300
  %465 = vst [vmem:[#allocation2 + $0x98] sm:$0xff] %v304
  %466 = vst.msk [vmem:[#allocation2 + $0xa0] sm:$0xff] %vm453, %v306
  %467 = vst [vmem:[#allocation2 + $0xb0] sm:$0xff] %v308
  %468 = vst.msk [vmem:[#allocation2 + $0xb8] sm:$0xff] %vm453, %v310
  %469 = vst [vmem:[#allocation2 + $0xc8] sm:$0xff] %v314
  %470 = vst.msk [vmem:[#allocation2 + $0xd0] sm:$0xff] %vm453, %v316
  %471 = vst [vmem:[#allocation2 + $0xe0] sm:$0xff] %v318
  %472 = vst.msk [vmem:[#allocation2 + $0xe8] sm:$0xff] %vm453, %v320
  %473 = vst [vmem:[#allocation2 + $0xf8] sm:$0xff] %v324
  %474 = vst.msk [vmem:[#allocation2 + $0x100] sm:$0xff] %vm453, %v326
  %475 = vst [vmem:[#allocation2 + $0x110] sm:$0xff] %v328
  %476 = vst.msk [vmem:[#allocation2 + $0x118] sm:$0xff] %vm453, %v330
  %477 = vst [vmem:[#allocation2 + $0x128] sm:$0xff] %v334
  %478 = vst.msk [vmem:[#allocation2 + $0x130] sm:$0xff] %vm453, %v336
  %479 = vst [vmem:[#allocation2 + $0x140] sm:$0xff] %v338
  %480 = vst.msk [vmem:[#allocation2 + $0x148] sm:$0xff] %vm453, %v340
  %481 = vst [vmem:[#allocation2 + $0x158] sm:$0xff] %v344
  %482 = vst.msk [vmem:[#allocation2 + $0x160] sm:$0xff] %vm453, %v346
  %483 = vst [vmem:[#allocation2 + $0x170] sm:$0xff] %v348
  %484 = vst.msk [vmem:[#allocation2 + $0x178] sm:$0xff] %vm453, %v350
  %485 = vst [vmem:[#allocation2 + $0x188] sm:$0xff] %v354
  %486 = vst.msk [vmem:[#allocation2 + $0x190] sm:$0xff] %vm453, %v356
  %487 = vst [vmem:[#allocation2 + $0x1a0] sm:$0xff] %v358
  %488 = vst.msk [vmem:[#allocation2 + $0x1a8] sm:$0xff] %vm453, %v360
  %489 = vst [vmem:[#allocation2 + $0x1b8] sm:$0xff] %v364
  %490 = vst.msk [vmem:[#allocation2 + $0x1c0] sm:$0xff] %vm453, %v366
  %491 = vst [vmem:[#allocation2 + $0x1d0] sm:$0xff] %v368
  %492 = vst.msk [vmem:[#allocation2 + $0x1d8] sm:$0xff] %vm453, %v370
  %493 = vst [vmem:[#allocation2 + $0x1e8] sm:$0xff] %v374
  %494 = vst.msk [vmem:[#allocation2 + $0x1f0] sm:$0xff] %vm453, %v376
  %495 = vst [vmem:[#allocation2 + $0x200] sm:$0xff] %v378
  %496 = vst.msk [vmem:[#allocation2 + $0x208] sm:$0xff] %vm453, %v380
  %497 = vst [vmem:[#allocation2 + $0x218] sm:$0xff] %v384
  %498 = vst.msk [vmem:[#allocation2 + $0x220] sm:$0xff] %vm453, %v386
  %499 = vst [vmem:[#allocation2 + $0x230] sm:$0xff] %v388
  %500 = vst.msk [vmem:[#allocation2 + $0x238] sm:$0xff] %vm453, %v390
  %501 = vst [vmem:[#allocation2 + $0x248] sm:$0xff] %v394
  %502 = vst.msk [vmem:[#allocation2 + $0x250] sm:$0xff] %vm453, %v396
  %503 = vst [vmem:[#allocation2 + $0x260] sm:$0xff] %v398
  %504 = vst.msk [vmem:[#allocation2 + $0x268] sm:$0xff] %vm453, %v400
  %505 = vst [vmem:[#allocation2 + $0x278] sm:$0xff] %v404
  %506 = vst.msk [vmem:[#allocation2 + $0x280] sm:$0xff] %vm453, %v406
  %507 = vst [vmem:[#allocation2 + $0x290] sm:$0xff] %v408
  %508 = vst.msk [vmem:[#allocation2 + $0x298] sm:$0xff] %vm453, %v410
  %509 = vst [vmem:[#allocation2 + $0x2a8] sm:$0xff] %v414
  %510 = vst.msk [vmem:[#allocation2 + $0x2b0] sm:$0xff] %vm453, %v416
  %511 = vst [vmem:[#allocation2 + $0x2c0] sm:$0xff] %v418
  %512 = vst.msk [vmem:[#allocation2 + $0x2c8] sm:$0xff] %vm453, %v420
  %513 = vst [vmem:[#allocation2 + $0x2d8] sm:$0xff] %v424
  %514 = vst.msk [vmem:[#allocation2 + $0x2e0] sm:$0xff] %vm453, %v426
  %515 = vst [vmem:[#allocation2 + $0x2f0] sm:$0xff] %v428
  %516 = vst.msk [vmem:[#allocation2 + $0x2f8] sm:$0xff] %vm453, %v430
  %517 = vst [vmem:[#allocation2 + $0x308] sm:$0xff] %v434
  %518 = vst.msk [vmem:[#allocation2 + $0x310] sm:$0xff] %vm453, %v436
  %519 = vst [vmem:[#allocation2 + $0x320] sm:$0xff] %v438
  %520 = vst.msk [vmem:[#allocation2 + $0x328] sm:$0xff] %vm453, %v440
  %521 = vst [vmem:[#allocation2 + $0x338] sm:$0xff] %v444
  %522 = vst.msk [vmem:[#allocation2 + $0x340] sm:$0xff] %vm453, %v446
  %523 = vst [vmem:[#allocation2 + $0x350] sm:$0xff] %v448
  %524 = vst.msk [vmem:[#allocation2 + $0x358] sm:$0xff] %vm453, %v450
  %v525 = vld [vmem:[#allocation2] sm:$0xff]
  %v526 = vld [vmem:[#allocation2 + $0x8] sm:$0xff]
  %v527 = vld [vmem:[#allocation2 + $0x10] sm:$0xff]
  %v528 = vld [vmem:[#allocation2 + $0x18] sm:$0xff]
  %v529 = vld [vmem:[#allocation2 + $0x20] sm:$0xff]
  %v530 = vld [vmem:[#allocation2 + $0x28] sm:$0xff]
  %v531 = vld [vmem:[#allocation2 + $0x30] sm:$0xff]
  %v532 = vld [vmem:[#allocation2 + $0x38] sm:$0xff]
  %v533 = vld [vmem:[#allocation2 + $0x40] sm:$0xff]
  %v534 = vld [vmem:[#allocation2 + $0x48] sm:$0xff]
  %v535 = vld [vmem:[#allocation2 + $0x50] sm:$0xff]
  %v536 = vld [vmem:[#allocation2 + $0x58] sm:$0xff]
  %v537 = vld [vmem:[%s2] ss:$8 sm:$0x3]
  %vm538 = vcmp.gt.f32.partialorder %v537, 0.5
  %v539 = vsel %vm538, 1, 0
  %v540 = vlaneseq
  %v541 = vshrl.u32 %v540, 7
  %v542 = vsub.s32 0, %v541
  %v543 = vrot.slane %v539, %v542
  %v544 = vlaneseq
  %v545 = vshrl.u32 %v544, 7
  %v546 = vsub.s32 1, %v545
  %v547 = vrot.slane %v539, %v546
  %vm548 = vcmp.eq.s32.totalorder %v543, 1
  %vm549 = vcmp.eq.s32.totalorder %v547, 1
  %562 = vrot.lane.b32.xlu0 %v525, 15
  %v563 = vpop.permute.xlu0 %562
  %564 = vrot.lane.b32.xlu0 %v526, 15
  %v565 = vpop.permute.xlu0 %564
  %566 = vrot.lane.b32.xlu0 %v527, 15
  %v567 = vpop.permute.xlu0 %566
  %568 = vrot.lane.b32.xlu0 %v528, 15
  %v569 = vpop.permute.xlu0 %568
  %570 = vrot.lane.b32.xlu0 %v529, 15
  %v571 = vpop.permute.xlu0 %570
  %572 = vrot.lane.b32.xlu0 %v530, 15
  %v573 = vpop.permute.xlu0 %572
  %574 = vrot.lane.b32.xlu0 %v531, 15
  %v575 = vpop.permute.xlu0 %574
  %576 = vrot.lane.b32.xlu0 %v532, 15
  %v577 = vpop.permute.xlu0 %576
  %578 = vrot.lane.b32.xlu0 %v533, 15
  %v579 = vpop.permute.xlu0 %578
  %580 = vrot.lane.b32.xlu0 %v534, 15
  %v581 = vpop.permute.xlu0 %580
  %582 = vrot.lane.b32.xlu0 %v535, 15
  %v583 = vpop.permute.xlu0 %582
  %584 = vrot.lane.b32.xlu0 %v536, 15
  %v585 = vpop.permute.xlu0 %584
  %vm586 = vcmask 121856
  %v587 = vsel %vm586, %v563, %v565
  %v588 = vsel %vm586, %v565, %v567
  %v589 = vsel %vm586, %v569, %v571
  %v590 = vsel %vm586, %v571, %v573
  %v591 = vsel %vm586, %v575, %v577
  %v592 = vsel %vm586, %v577, %v579
  %v593 = vsel %vm586, %v581, %v583
  %v594 = vsel %vm586, %v583, %v585
  %v603 = vsel %vm548, %v587, 0.0
  %v604 = vsel %vm549, %v588, 0.0
  %v605 = vsel %vm548, %v589, 0.0
  %v606 = vsel %vm549, %v590, 0.0
  %v607 = vsel %vm548, %v591, 0.0
  %v608 = vsel %vm549, %v592, 0.0
  %v609 = vsel %vm548, %v593, 0.0
  %v610 = vsel %vm549, %v594, 0.0
  %v611 = vadd.f32 %v603, 0.0
  %v612 = vadd.f32 %v604, 0.0
  %v613 = vadd.f32 %v605, 0.0
  %v614 = vadd.f32 %v606, 0.0
  %v615 = vadd.f32 %v607, 0.0
  %v616 = vadd.f32 %v608, 0.0
  %v617 = vadd.f32 %v609, 0.0
  %v618 = vadd.f32 %v610, 0.0
  %v619 = vld [vmem:[#allocation2 + $0x60] sm:$0xff]
  %v620 = vld [vmem:[#allocation2 + $0x68] sm:$0xff]
  %v621 = vld [vmem:[#allocation2 + $0x70] sm:$0xff]
  %v622 = vld [vmem:[#allocation2 + $0x78] sm:$0xff]
  %v623 = vld [vmem:[#allocation2 + $0x80] sm:$0xff]
  %v624 = vld [vmem:[#allocation2 + $0x88] sm:$0xff]
  %v625 = vld [vmem:[#allocation2 + $0x90] sm:$0xff]
  %v626 = vld [vmem:[#allocation2 + $0x98] sm:$0xff]
  %v627 = vld [vmem:[#allocation2 + $0xa0] sm:$0xff]
  %v628 = vld [vmem:[#allocation2 + $0xa8] sm:$0xff]
  %v629 = vld [vmem:[#allocation2 + $0xb0] sm:$0xff]
  %v630 = vld [vmem:[#allocation2 + $0xb8] sm:$0xff]
  %s631 = scalar_lea.vmem %s2, 1
  %v632 = vld [vmem:[%s631] ss:$8 sm:$0x3]
  %vm633 = vcmp.gt.f32.partialorder %v632, 0.5
  %v634 = vsel %vm633, 1, 0
  %v635 = vlaneseq
  %v636 = vshrl.u32 %v635, 7
  %v637 = vsub.s32 0, %v636
  %v638 = vrot.slane %v634, %v637
  %v639 = vlaneseq
  %v640 = vshrl.u32 %v639, 7
  %v641 = vsub.s32 1, %v640
  %v642 = vrot.slane %v634, %v641
  %vm643 = vcmp.eq.s32.totalorder %v638, 1
  %vm644 = vcmp.eq.s32.totalorder %v642, 1
  %657 = vrot.lane.b32.xlu0 %v619, 14
  %v658 = vpop.permute.xlu0 %657
  %659 = vrot.lane.b32.xlu0 %v620, 14
  %v660 = vpop.permute.xlu0 %659
  %661 = vrot.lane.b32.xlu0 %v621, 14
  %v662 = vpop.permute.xlu0 %661
  %663 = vrot.lane.b32.xlu0 %v622, 14
  %v664 = vpop.permute.xlu0 %663
  %665 = vrot.lane.b32.xlu0 %v623, 14
  %v666 = vpop.permute.xlu0 %665
  %667 = vrot.lane.b32.xlu0 %v624, 14
  %v668 = vpop.permute.xlu0 %667
  %669 = vrot.lane.b32.xlu0 %v625, 14
  %v670 = vpop.permute.xlu0 %669
  %671 = vrot.lane.b32.xlu0 %v626, 14
  %v672 = vpop.permute.xlu0 %671
  %673 = vrot.lane.b32.xlu0 %v627, 14
  %v674 = vpop.permute.xlu0 %673
  %675 = vrot.lane.b32.xlu0 %v628, 14
  %v676 = vpop.permute.xlu0 %675
  %677 = vrot.lane.b32.xlu0 %v629, 14
  %v678 = vpop.permute.xlu0 %677
  %679 = vrot.lane.b32.xlu0 %v630, 14
  %v680 = vpop.permute.xlu0 %679
  %vm681 = vcmask 113664
  %v682 = vsel %vm681, %v658, %v660
  %v683 = vsel %vm681, %v660, %v662
  %v684 = vsel %vm681, %v664, %v666
  %v685 = vsel %vm681, %v666, %v668
  %v686 = vsel %vm681, %v670, %v672
  %v687 = vsel %vm681, %v672, %v674
  %v688 = vsel %vm681, %v676, %v678
  %v689 = vsel %vm681, %v678, %v680
  %v698 = vsel %vm643, %v682, 0.0
  %v699 = vsel %vm644, %v683, 0.0
  %v700 = vsel %vm643, %v684, 0.0
  %v701 = vsel %vm644, %v685, 0.0
  %v702 = vsel %vm643, %v686, 0.0
  %v703 = vsel %vm644, %v687, 0.0
  %v704 = vsel %vm643, %v688, 0.0
  %v705 = vsel %vm644, %v689, 0.0
  %v706 = vadd.f32 %v611, %v698
  %v707 = vadd.f32 %v612, %v699
  %v708 = vadd.f32 %v613, %v700
  %v709 = vadd.f32 %v614, %v701
  %v710 = vadd.f32 %v615, %v702
  %v711 = vadd.f32 %v616, %v703
  %v712 = vadd.f32 %v617, %v704
  %v713 = vadd.f32 %v618, %v705
  %v714 = vld [vmem:[#allocation2 + $0xc0] sm:$0xff]
  %v715 = vld [vmem:[#allocation2 + $0xc8] sm:$0xff]
  %v716 = vld [vmem:[#allocation2 + $0xd0] sm:$0xff]
  %v717 = vld [vmem:[#allocation2 + $0xd8] sm:$0xff]
  %v718 = vld [vmem:[#allocation2 + $0xe0] sm:$0xff]
  %v719 = vld [vmem:[#allocation2 + $0xe8] sm:$0xff]
  %v720 = vld [vmem:[#allocation2 + $0xf0] sm:$0xff]
  %v721 = vld [vmem:[#allocation2 + $0xf8] sm:$0xff]
  %v722 = vld [vmem:[#allocation2 + $0x100] sm:$0xff]
  %v723 = vld [vmem:[#allocation2 + $0x108] sm:$0xff]
  %v724 = vld [vmem:[#allocation2 + $0x110] sm:$0xff]
  %v725 = vld [vmem:[#allocation2 + $0x118] sm:$0xff]
  %s726 = scalar_lea.vmem %s2, 2
  %v727 = vld [vmem:[%s726] ss:$8 sm:$0x3]
  %vm728 = vcmp.gt.f32.partialorder %v727, 0.5
  %v729 = vsel %vm728, 1, 0
  %v730 = vlaneseq
  %v731 = vshrl.u32 %v730, 7
  %v732 = vsub.s32 0, %v731
  %v733 = vrot.slane %v729, %v732
  %v734 = vlaneseq
  %v735 = vshrl.u32 %v734, 7
  %v736 = vsub.s32 1, %v735
  %v737 = vrot.slane %v729, %v736
  %vm738 = vcmp.eq.s32.totalorder %v733, 1
  %vm739 = vcmp.eq.s32.totalorder %v737, 1
  %752 = vrot.lane.b32.xlu0 %v714, 13
  %v753 = vpop.permute.xlu0 %752
  %754 = vrot.lane.b32.xlu0 %v715, 13
  %v755 = vpop.permute.xlu0 %754
  %756 = vrot.lane.b32.xlu0 %v716, 13
  %v757 = vpop.permute.xlu0 %756
  %758 = vrot.lane.b32.xlu0 %v717, 13
  %v759 = vpop.permute.xlu0 %758
  %760 = vrot.lane.b32.xlu0 %v718, 13
  %v761 = vpop.permute.xlu0 %760
  %762 = vrot.lane.b32.xlu0 %v719, 13
  %v763 = vpop.permute.xlu0 %762
  %764 = vrot.lane.b32.xlu0 %v720, 13
  %v765 = vpop.permute.xlu0 %764
  %766 = vrot.lane.b32.xlu0 %v721, 13
  %v767 = vpop.permute.xlu0 %766
  %768 = vrot.lane.b32.xlu0 %v722, 13
  %v769 = vpop.permute.xlu0 %768
  %770 = vrot.lane.b32.xlu0 %v723, 13
  %v771 = vpop.permute.xlu0 %770
  %772 = vrot.lane.b32.xlu0 %v724, 13
  %v773 = vpop.permute.xlu0 %772
  %774 = vrot.lane.b32.xlu0 %v725, 13
  %v775 = vpop.permute.xlu0 %774
  %vm776 = vcmask 105472
  %v777 = vsel %vm776, %v753, %v755
  %v778 = vsel %vm776, %v755, %v757
  %v779 = vsel %vm776, %v759, %v761
  %v780 = vsel %vm776, %v761, %v763
  %v781 = vsel %vm776, %v765, %v767
  %v782 = vsel %vm776, %v767, %v769
  %v783 = vsel %vm776, %v771, %v773
  %v784 = vsel %vm776, %v773, %v775
  %v793 = vsel %vm738, %v777, 0.0
  %v794 = vsel %vm739, %v778, 0.0
  %v795 = vsel %vm738, %v779, 0.0
  %v796 = vsel %vm739, %v780, 0.0
  %v797 = vsel %vm738, %v781, 0.0
  %v798 = vsel %vm739, %v782, 0.0
  %v799 = vsel %vm738, %v783, 0.0
  %v800 = vsel %vm739, %v784, 0.0
  %v801 = vadd.f32 %v706, %v793
  %v802 = vadd.f32 %v707, %v794
  %v803 = vadd.f32 %v708, %v795
  %v804 = vadd.f32 %v709, %v796
  %v805 = vadd.f32 %v710, %v797
  %v806 = vadd.f32 %v711, %v798
  %v807 = vadd.f32 %v712, %v799
  %v808 = vadd.f32 %v713, %v800
  %v809 = vld [vmem:[#allocation2 + $0x120] sm:$0xff]
  %v810 = vld [vmem:[#allocation2 + $0x128] sm:$0xff]
  %v811 = vld [vmem:[#allocation2 + $0x130] sm:$0xff]
  %v812 = vld [vmem:[#allocation2 + $0x138] sm:$0xff]
  %v813 = vld [vmem:[#allocation2 + $0x140] sm:$0xff]
  %v814 = vld [vmem:[#allocation2 + $0x148] sm:$0xff]
  %v815 = vld [vmem:[#allocation2 + $0x150] sm:$0xff]
  %v816 = vld [vmem:[#allocation2 + $0x158] sm:$0xff]
  %v817 = vld [vmem:[#allocation2 + $0x160] sm:$0xff]
  %v818 = vld [vmem:[#allocation2 + $0x168] sm:$0xff]
  %v819 = vld [vmem:[#allocation2 + $0x170] sm:$0xff]
  %v820 = vld [vmem:[#allocation2 + $0x178] sm:$0xff]
  %s821 = scalar_lea.vmem %s2, 3
  %v822 = vld [vmem:[%s821] ss:$8 sm:$0x3]
  %vm823 = vcmp.gt.f32.partialorder %v822, 0.5
  %v824 = vsel %vm823, 1, 0
  %v825 = vlaneseq
  %v826 = vshrl.u32 %v825, 7
  %v827 = vsub.s32 0, %v826
  %v828 = vrot.slane %v824, %v827
  %v829 = vlaneseq
  %v830 = vshrl.u32 %v829, 7
  %v831 = vsub.s32 1, %v830
  %v832 = vrot.slane %v824, %v831
  %vm833 = vcmp.eq.s32.totalorder %v828, 1
  %vm834 = vcmp.eq.s32.totalorder %v832, 1
  %847 = vrot.lane.b32.xlu0 %v809, 1
  %v848 = vpop.permute.xlu0 %847
  %849 = vrot.lane.b32.xlu0 %v810, 1
  %v850 = vpop.permute.xlu0 %849
  %851 = vrot.lane.b32.xlu0 %v811, 1
  %v852 = vpop.permute.xlu0 %851
  %853 = vrot.lane.b32.xlu0 %v812, 1
  %v854 = vpop.permute.xlu0 %853
  %855 = vrot.lane.b32.xlu0 %v813, 1
  %v856 = vpop.permute.xlu0 %855
  %857 = vrot.lane.b32.xlu0 %v814, 1
  %v858 = vpop.permute.xlu0 %857
  %859 = vrot.lane.b32.xlu0 %v815, 1
  %v860 = vpop.permute.xlu0 %859
  %861 = vrot.lane.b32.xlu0 %v816, 1
  %v862 = vpop.permute.xlu0 %861
  %863 = vrot.lane.b32.xlu0 %v817, 1
  %v864 = vpop.permute.xlu0 %863
  %865 = vrot.lane.b32.xlu0 %v818, 1
  %v866 = vpop.permute.xlu0 %865
  %867 = vrot.lane.b32.xlu0 %v819, 1
  %v868 = vpop.permute.xlu0 %867
  %869 = vrot.lane.b32.xlu0 %v820, 1
  %v870 = vpop.permute.xlu0 %869
  %vm871 = vcmask 7168
  %v872 = vsel %vm871, %v848, %v850
  %v873 = vsel %vm871, %v850, %v852
  %v874 = vsel %vm871, %v854, %v856
  %v875 = vsel %vm871, %v856, %v858
  %v876 = vsel %vm871, %v860, %v862
  %v877 = vsel %vm871, %v862, %v864
  %v878 = vsel %vm871, %v866, %v868
  %v879 = vsel %vm871, %v868, %v870
  %v888 = vsel %vm833, %v872, 0.0
  %v889 = vsel %vm834, %v873, 0.0
  %v890 = vsel %vm833, %v874, 0.0
  %v891 = vsel %vm834, %v875, 0.0
  %v892 = vsel %vm833, %v876, 0.0
  %v893 = vsel %vm834, %v877, 0.0
  %v894 = vsel %vm833, %v878, 0.0
  %v895 = vsel %vm834, %v879, 0.0
  %v896 = vadd.f32 %v801, %v888
  %v897 = vadd.f32 %v802, %v889
  %v898 = vadd.f32 %v803, %v890
  %v899 = vadd.f32 %v804, %v891
  %v900 = vadd.f32 %v805, %v892
  %v901 = vadd.f32 %v806, %v893
  %v902 = vadd.f32 %v807, %v894
  %v903 = vadd.f32 %v808, %v895
  %v904 = vld [vmem:[#allocation2 + $0x188] sm:$0xff]
  %v905 = vld [vmem:[#allocation2 + $0x190] sm:$0xff]
  %v906 = vld [vmem:[#allocation2 + $0x1a0] sm:$0xff]
  %v907 = vld [vmem:[#allocation2 + $0x1a8] sm:$0xff]
  %v908 = vld [vmem:[#allocation2 + $0x1b8] sm:$0xff]
  %v909 = vld [vmem:[#allocation2 + $0x1c0] sm:$0xff]
  %v910 = vld [vmem:[#allocation2 + $0x1d0] sm:$0xff]
  %v911 = vld [vmem:[#allocation2 + $0x1d8] sm:$0xff]
  %s912 = scalar_lea.vmem %s2, 4
  %v913 = vld [vmem:[%s912] ss:$8 sm:$0x3]
  %vm914 = vcmp.gt.f32.partialorder %v913, 0.5
  %v915 = vsel %vm914, 1, 0
  %v916 = vlaneseq
  %v917 = vshrl.u32 %v916, 7
  %v918 = vsub.s32 0, %v917
  %v919 = vrot.slane %v915, %v918
  %v920 = vlaneseq
  %v921 = vshrl.u32 %v920, 7
  %v922 = vsub.s32 1, %v921
  %v923 = vrot.slane %v915, %v922
  %vm924 = vcmp.eq.s32.totalorder %v919, 1
  %vm925 = vcmp.eq.s32.totalorder %v923, 1
  %v926 = vsel %vm924, %v904, 0.0
  %v927 = vsel %vm925, %v905, 0.0
  %v928 = vsel %vm924, %v906, 0.0
  %v929 = vsel %vm925, %v907, 0.0
  %v930 = vsel %vm924, %v908, 0.0
  %v931 = vsel %vm925, %v909, 0.0
  %v932 = vsel %vm924, %v910, 0.0
  %v933 = vsel %vm925, %v911, 0.0
  %v934 = vadd.f32 %v896, %v926
  %v935 = vadd.f32 %v897, %v927
  %v936 = vadd.f32 %v898, %v928
  %v937 = vadd.f32 %v899, %v929
  %v938 = vadd.f32 %v900, %v930
  %v939 = vadd.f32 %v901, %v931
  %v940 = vadd.f32 %v902, %v932
  %v941 = vadd.f32 %v903, %v933
  %v942 = vld [vmem:[#allocation2 + $0x1e8] sm:$0xff]
  %v943 = vld [vmem:[#allocation2 + $0x1f0] sm:$0xff]
  %v944 = vld [vmem:[#allocation2 + $0x200] sm:$0xff]
  %v945 = vld [vmem:[#allocation2 + $0x208] sm:$0xff]
  %v946 = vld [vmem:[#allocation2 + $0x218] sm:$0xff]
  %v947 = vld [vmem:[#allocation2 + $0x220] sm:$0xff]
  %v948 = vld [vmem:[#allocation2 + $0x230] sm:$0xff]
  %v949 = vld [vmem:[#allocation2 + $0x238] sm:$0xff]
  %s950 = scalar_lea.vmem %s2, 5
  %v951 = vld [vmem:[%s950] ss:$8 sm:$0x3]
  %vm952 = vcmp.gt.f32.partialorder %v951, 0.5
  %v953 = vsel %vm952, 1, 0
  %v954 = vlaneseq
  %v955 = vshrl.u32 %v954, 7
  %v956 = vsub.s32 0, %v955
  %v957 = vrot.slane %v953, %v956
  %v958 = vlaneseq
  %v959 = vshrl.u32 %v958, 7
  %v960 = vsub.s32 1, %v959
  %v961 = vrot.slane %v953, %v960
  %vm962 = vcmp.eq.s32.totalorder %v957, 1
  %vm963 = vcmp.eq.s32.totalorder %v961, 1
  %972 = vrot.lane.b32.xlu0 %v942, 127
  %v973 = vpop.permute.xlu0 %972
  %974 = vrot.lane.b32.xlu0 %v943, 127
  %v975 = vpop.permute.xlu0 %974
  %976 = vrot.lane.b32.xlu0 %v944, 127
  %v977 = vpop.permute.xlu0 %976
  %978 = vrot.lane.b32.xlu0 %v945, 127
  %v979 = vpop.permute.xlu0 %978
  %980 = vrot.lane.b32.xlu0 %v946, 127
  %v981 = vpop.permute.xlu0 %980
  %982 = vrot.lane.b32.xlu0 %v947, 127
  %v983 = vpop.permute.xlu0 %982
  %984 = vrot.lane.b32.xlu0 %v948, 127
  %v985 = vpop.permute.xlu0 %984
  %986 = vrot.lane.b32.xlu0 %v949, 127
  %v987 = vpop.permute.xlu0 %986
  %vm988 = vcmask 1039360
  %v989 = vsel %vm988, %v973, %v975
  %v990 = vsel %vm988, %v977, %v979
  %v991 = vsel %vm988, %v981, %v983
  %v992 = vsel %vm988, %v985, %v987
  %v1001 = vsel %vm962, %v989, 0.0
  %v1002 = vsel %vm963, %v975, 0.0
  %v1003 = vsel %vm962, %v990, 0.0
  %v1004 = vsel %vm963, %v979, 0.0
  %v1005 = vsel %vm962, %v991, 0.0
  %v1006 = vsel %vm963, %v983, 0.0
  %v1007 = vsel %vm962, %v992, 0.0
  %v1008 = vsel %vm963, %v987, 0.0
  %v1009 = vadd.f32 %v934, %v1001
  %v1010 = vadd.f32 %v935, %v1002
  %v1011 = vadd.f32 %v936, %v1003
  %v1012 = vadd.f32 %v937, %v1004
  %v1013 = vadd.f32 %v938, %v1005
  %v1014 = vadd.f32 %v939, %v1006
  %v1015 = vadd.f32 %v940, %v1007
  %v1016 = vadd.f32 %v941, %v1008
  %v1017 = vld [vmem:[#allocation2 + $0x248] sm:$0xff]
  %v1018 = vld [vmem:[#allocation2 + $0x250] sm:$0xff]
  %v1019 = vld [vmem:[#allocation2 + $0x260] sm:$0xff]
  %v1020 = vld [vmem:[#allocation2 + $0x268] sm:$0xff]
  %v1021 = vld [vmem:[#allocation2 + $0x278] sm:$0xff]
  %v1022 = vld [vmem:[#allocation2 + $0x280] sm:$0xff]
  %v1023 = vld [vmem:[#allocation2 + $0x290] sm:$0xff]
  %v1024 = vld [vmem:[#allocation2 + $0x298] sm:$0xff]
  %s1025 = scalar_lea.vmem %s2, 6
  %v1026 = vld [vmem:[%s1025] ss:$8 sm:$0x3]
  %vm1027 = vcmp.gt.f32.partialorder %v1026, 0.5
  %v1028 = vsel %vm1027, 1, 0
  %v1029 = vlaneseq
  %v1030 = vshrl.u32 %v1029, 7
  %v1031 = vsub.s32 0, %v1030
  %v1032 = vrot.slane %v1028, %v1031
  %v1033 = vlaneseq
  %v1034 = vshrl.u32 %v1033, 7
  %v1035 = vsub.s32 1, %v1034
  %v1036 = vrot.slane %v1028, %v1035
  %vm1037 = vcmp.eq.s32.totalorder %v1032, 1
  %vm1038 = vcmp.eq.s32.totalorder %v1036, 1
  %1047 = vrot.lane.b32.xlu0 %v1017, 115
  %v1048 = vpop.permute.xlu0 %1047
  %1049 = vrot.lane.b32.xlu0 %v1018, 115
  %v1050 = vpop.permute.xlu0 %1049
  %1051 = vrot.lane.b32.xlu0 %v1019, 115
  %v1052 = vpop.permute.xlu0 %1051
  %1053 = vrot.lane.b32.xlu0 %v1020, 115
  %v1054 = vpop.permute.xlu0 %1053
  %1055 = vrot.lane.b32.xlu0 %v1021, 115
  %v1056 = vpop.permute.xlu0 %1055
  %1057 = vrot.lane.b32.xlu0 %v1022, 115
  %v1058 = vpop.permute.xlu0 %1057
  %1059 = vrot.lane.b32.xlu0 %v1023, 115
  %v1060 = vpop.permute.xlu0 %1059
  %1061 = vrot.lane.b32.xlu0 %v1024, 115
  %v1062 = vpop.permute.xlu0 %1061
  %vm1063 = vcmask 941056
  %v1064 = vsel %vm1063, %v1048, %v1050
  %v1065 = vsel %vm1063, %v1052, %v1054
  %v1066 = vsel %vm1063, %v1056, %v1058
  %v1067 = vsel %vm1063, %v1060, %v1062
  %v1076 = vsel %vm1037, %v1064, 0.0
  %v1077 = vsel %vm1038, %v1050, 0.0
  %v1078 = vsel %vm1037, %v1065, 0.0
  %v1079 = vsel %vm1038, %v1054, 0.0
  %v1080 = vsel %vm1037, %v1066, 0.0
  %v1081 = vsel %vm1038, %v1058, 0.0
  %v1082 = vsel %vm1037, %v1067, 0.0
  %v1083 = vsel %vm1038, %v1062, 0.0
  %v1084 = vadd.f32 %v1009, %v1076
  %v1085 = vadd.f32 %v1010, %v1077
  %v1086 = vadd.f32 %v1011, %v1078
  %v1087 = vadd.f32 %v1012, %v1079
  %v1088 = vadd.f32 %v1013, %v1080
  %v1089 = vadd.f32 %v1014, %v1081
  %v1090 = vadd.f32 %v1015, %v1082
  %v1091 = vadd.f32 %v1016, %v1083
  %v1092 = vld [vmem:[#allocation2 + $0x2a8] sm:$0xff]
  %v1093 = vld [vmem:[#allocation2 + $0x2b0] sm:$0xff]
  %v1094 = vld [vmem:[#allocation2 + $0x2c0] sm:$0xff]
  %v1095 = vld [vmem:[#allocation2 + $0x2c8] sm:$0xff]
  %v1096 = vld [vmem:[#allocation2 + $0x2d8] sm:$0xff]
  %v1097 = vld [vmem:[#allocation2 + $0x2e0] sm:$0xff]
  %v1098 = vld [vmem:[#allocation2 + $0x2f0] sm:$0xff]
  %v1099 = vld [vmem:[#allocation2 + $0x2f8] sm:$0xff]
  %s1100 = scalar_lea.vmem %s2, 7
  %v1101 = vld [vmem:[%s1100] ss:$8 sm:$0x3]
  %vm1102 = vcmp.gt.f32.partialorder %v1101, 0.5
  %v1103 = vsel %vm1102, 1, 0
  %v1104 = vlaneseq
  %v1105 = vshrl.u32 %v1104, 7
  %v1106 = vsub.s32 0, %v1105
  %v1107 = vrot.slane %v1103, %v1106
  %v1108 = vlaneseq
  %v1109 = vshrl.u32 %v1108, 7
  %v1110 = vsub.s32 1, %v1109
  %v1111 = vrot.slane %v1103, %v1110
  %vm1112 = vcmp.eq.s32.totalorder %v1107, 1
  %vm1113 = vcmp.eq.s32.totalorder %v1111, 1
  %1122 = vrot.lane.b32.xlu0 %v1092, 114
  %v1123 = vpop.permute.xlu0 %1122
  %1124 = vrot.lane.b32.xlu0 %v1093, 114
  %v1125 = vpop.permute.xlu0 %1124
  %1126 = vrot.lane.b32.xlu0 %v1094, 114
  %v1127 = vpop.permute.xlu0 %1126
  %1128 = vrot.lane.b32.xlu0 %v1095, 114
  %v1129 = vpop.permute.xlu0 %1128
  %1130 = vrot.lane.b32.xlu0 %v1096, 114
  %v1131 = vpop.permute.xlu0 %1130
  %1132 = vrot.lane.b32.xlu0 %v1097, 114
  %v1133 = vpop.permute.xlu0 %1132
  %1134 = vrot.lane.b32.xlu0 %v1098, 114
  %v1135 = vpop.permute.xlu0 %1134
  %1136 = vrot.lane.b32.xlu0 %v1099, 114
  %v1137 = vpop.permute.xlu0 %1136
  %vm1138 = vcmask 932864
  %v1139 = vsel %vm1138, %v1123, %v1125
  %v1140 = vsel %vm1138, %v1127, %v1129
  %v1141 = vsel %vm1138, %v1131, %v1133
  %v1142 = vsel %vm1138, %v1135, %v1137
  %v1151 = vsel %vm1112, %v1139, 0.0
  %v1152 = vsel %vm1113, %v1125, 0.0
  %v1153 = vsel %vm1112, %v1140, 0.0
  %v1154 = vsel %vm1113, %v1129, 0.0
  %v1155 = vsel %vm1112, %v1141, 0.0
  %v1156 = vsel %vm1113, %v1133, 0.0
  %v1157 = vsel %vm1112, %v1142, 0.0
  %v1158 = vsel %vm1113, %v1137, 0.0
  %v1159 = vadd.f32 %v1084, %v1151
  %v1160 = vadd.f32 %v1085, %v1152
  %v1161 = vadd.f32 %v1086, %v1153
  %v1162 = vadd.f32 %v1087, %v1154
  %v1163 = vadd.f32 %v1088, %v1155
  %v1164 = vadd.f32 %v1089, %v1156
  %v1165 = vadd.f32 %v1090, %v1157
  %v1166 = vadd.f32 %v1091, %v1158
  %v1167 = vld [vmem:[#allocation2 + $0x308] sm:$0xff]
  %v1168 = vld [vmem:[#allocation2 + $0x310] sm:$0xff]
  %v1169 = vld [vmem:[#allocation2 + $0x320] sm:$0xff]
  %v1170 = vld [vmem:[#allocation2 + $0x328] sm:$0xff]
  %v1171 = vld [vmem:[#allocation2 + $0x338] sm:$0xff]
  %v1172 = vld [vmem:[#allocation2 + $0x340] sm:$0xff]
  %v1173 = vld [vmem:[#allocation2 + $0x350] sm:$0xff]
  %v1174 = vld [vmem:[#allocation2 + $0x358] sm:$0xff]
  %s1175 = scalar_lea.vmem %s2, 16
  %v1176 = vld [vmem:[%s1175] ss:$8 sm:$0x3]
  %vm1177 = vcmp.gt.f32.partialorder %v1176, 0.5
  %v1178 = vsel %vm1177, 1, 0
  %v1179 = vlaneseq
  %v1180 = vshrl.u32 %v1179, 7
  %v1181 = vsub.s32 0, %v1180
  %v1182 = vrot.slane %v1178, %v1181
  %v1183 = vlaneseq
  %v1184 = vshrl.u32 %v1183, 7
  %v1185 = vsub.s32 1, %v1184
  %v1186 = vrot.slane %v1178, %v1185
  %vm1187 = vcmp.eq.s32.totalorder %v1182, 1
  %vm1188 = vcmp.eq.s32.totalorder %v1186, 1
  %1197 = vrot.lane.b32.xlu0 %v1167, 113
  %v1198 = vpop.permute.xlu0 %1197
  %1199 = vrot.lane.b32.xlu0 %v1168, 113
  %v1200 = vpop.permute.xlu0 %1199
  %1201 = vrot.lane.b32.xlu0 %v1169, 113
  %v1202 = vpop.permute.xlu0 %1201
  %1203 = vrot.lane.b32.xlu0 %v1170, 113
  %v1204 = vpop.permute.xlu0 %1203
  %1205 = vrot.lane.b32.xlu0 %v1171, 113
  %v1206 = vpop.permute.xlu0 %1205
  %1207 = vrot.lane.b32.xlu0 %v1172, 113
  %v1208 = vpop.permute.xlu0 %1207
  %1209 = vrot.lane.b32.xlu0 %v1173, 113
  %v1210 = vpop.permute.xlu0 %1209
  %1211 = vrot.lane.b32.xlu0 %v1174, 113
  %v1212 = vpop.permute.xlu0 %1211
  %vm1213 = vcmask 924672
  %v1214 = vsel %vm1213, %v1198, %v1200
  %v1215 = vsel %vm1213, %v1202, %v1204
  %v1216 = vsel %vm1213, %v1206, %v1208
  %v1217 = vsel %vm1213, %v1210, %v1212
  %v1226 = vsel %vm1187, %v1214, 0.0
  %v1227 = vsel %vm1188, %v1200, 0.0
  %v1228 = vsel %vm1187, %v1215, 0.0
  %v1229 = vsel %vm1188, %v1204, 0.0
  %v1230 = vsel %vm1187, %v1216, 0.0
  %v1231 = vsel %vm1188, %v1208, 0.0
  %v1232 = vsel %vm1187, %v1217, 0.0
  %v1233 = vsel %vm1188, %v1212, 0.0
  %v1234 = vadd.f32 %v1159, %v1226
  %v1235 = vadd.f32 %v1160, %v1227
  %v1236 = vadd.f32 %v1161, %v1228
  %v1237 = vadd.f32 %v1162, %v1229
  %v1238 = vadd.f32 %v1163, %v1230
  %v1239 = vadd.f32 %v1164, %v1231
  %v1240 = vadd.f32 %v1165, %v1232
  %v1241 = vadd.f32 %v1166, %v1233
  %1242 = vst [vmem:[%s3] sm:$0xff] %v1234
  %1243 = vst.msk [vmem:[%s3 + $0x8] sm:$0xff] %vm453, %v1235
  %1244 = vst [vmem:[%s3 + $0x10] sm:$0xff] %v1236
  %1245 = vst.msk [vmem:[%s3 + $0x18] sm:$0xff] %vm453, %v1237
  %1246 = vst [vmem:[%s3 + $0x20] sm:$0xff] %v1238
  %1247 = vst.msk [vmem:[%s3 + $0x28] sm:$0xff] %vm453, %v1239
  %1248 = vst [vmem:[%s3 + $0x30] sm:$0xff] %v1240
  %1249 = vst.msk [vmem:[%s3 + $0x38] sm:$0xff] %vm453, %v1241
  // Predicated region
  $region14: #{relu_conv2d_3x3.1} parent=0 // pred_check
    _
  $region15: #{relu_conv2d_3x3.1} parent=0 // pred_check_branch
    %1251 = sbr.rel (0) target = $region17
  $region16: #{relu_conv2d_3x3.1} parent=0 // pred_region
    _
  $region17: #{relu_conv2d_3x3.1} parent=0 // pred_fallthru
    _
  // Predicated region
  $region18: #{relu_conv2d_3x3.1} parent=0 // pred_check
    _
  $region19: #{relu_conv2d_3x3.1} parent=0 // pred_check_branch
    %1253 = sbr.rel (0) target = $region21
  $region20: #{relu_conv2d_3x3.1} parent=0 // pred_region
    _
  $region21: #{relu_conv2d_3x3.1} parent=0 // pred_fallthru
    _

</llo_original>
